<compile_context>
chip_gen: v6e
topology: v6e:2x2x1
jax: 0.10.0
libtpu: 0.0.40
codegen_flags: <defaults>
</compile_context>

<pallas_src>
import jax
import jax.numpy as jnp
from jax.experimental import pallas as pl
from jax.experimental.pallas import tpu as pltpu


HIDDEN = 128  # fixed by the PyTorch module: nn.Linear(obs, 128)


def _round_up(x, m):
    return (x + m - 1) // m * m


def _pick_batch_tile(B, block_b, min_steps):
    """Batch tile: multiple of 16, <= block_b, and >= min_steps grid steps for large B."""
    if B <= 16:
        # Block equal to the full batch dim (legal even when not a multiple of 8).
        return B
    tb = _round_up(pl.cdiv(B, min_steps), 16)
    return max(16, min(block_b, tb))


def policy_kernel(x_ref, w1_ref, b1_ref, w2_ref, b2_ref, out_ref):
    # Hidden layer: bf16 operands on the MXU (cast in-kernel, x arrives as f32),
    # f32 accumulation, f32 bias + ReLU, single cast back to bf16 for the 2nd matmul.
    x = x_ref[...].astype(jnp.bfloat16)
    h = jnp.dot(x, w1_ref[...], preferred_element_type=jnp.float32)
    h = jnp.maximum(h + b1_ref[...], 0.0).astype(jnp.bfloat16)   # b1 is (1, H)

    # Output layer: logits in f32.
    logits = jnp.dot(h, w2_ref[...], preferred_element_type=jnp.float32)
    logits = logits + b2_ref[...]                                # b2 is (1, A)

    # Numerically stable softmax over the (unpadded) action axis.
    m = jnp.max(logits, axis=-1, keepdims=True)
    e = jnp.exp(logits - m)
    s = jnp.sum(e, axis=-1, keepdims=True)
    # EUP reciprocal instead of a VALU divide (EUP slot is otherwise idle here).
    out_ref[...] = e * pl.reciprocal(s, approx=True)


def policy_network(x, w1, b1, w2, b2, *, block_b=2048, min_grid_steps=2):
    """x: (B, obs) f32. w1: (obs, H), b1: (1, H), w2: (H, A), b2: (1, A).
    Returns (B, A) f32 action probabilities (softmax rows)."""
    B, obs = x.shape
    H = w1.shape[1]
    A = w2.shape[1]

    tb = _pick_batch_tile(B, block_b, min_grid_steps)
    grid = (pl.cdiv(B, tb),)

    # One-time, tiny casts (weights/biases only -- x goes in untouched).
    w1_bf = w1.astype(jnp.bfloat16)
    w2_bf = w2.astype(jnp.bfloat16)
    b1_f = b1.reshape(1, H).astype(jnp.float32)
    b2_f = b2.reshape(1, A).astype(jnp.float32)

    return pl.pallas_call(
        policy_kernel,
        out_shape=jax.ShapeDtypeStruct((B, A), jnp.float32),
        grid=grid,
        in_specs=[
            pl.BlockSpec((tb, obs), lambda i: (i, 0)),  # x: tiled over batch, unpadded K
            pl.BlockSpec((obs, H), lambda i: (0, 0)),   # w1: VMEM-resident
            pl.BlockSpec((1, H), lambda i: (0, 0)),     # b1: VMEM-resident
            pl.BlockSpec((H, A), lambda i: (0, 0)),     # w2: VMEM-resident
            pl.BlockSpec((1, A), lambda i: (0, 0)),     # b2: VMEM-resident
        ],
        out_specs=pl.BlockSpec((tb, A), lambda i: (i, 0)),  # unpadded, final shape
        compiler_params=pltpu.CompilerParams(
            dimension_semantics=("parallel",),          # megacore shard on v7x
        ),
    )(x, w1_bf, b1_f, w2_bf, b2_f)


def init_params(key, observation_space, hidden, action_space):
    # Deterministic init mimicking torch's default Linear init (uniform +/- 1/sqrt(fan_in)).
    k1, k2, k3, k4 = jax.random.split(key, 4)
    bound1 = 1.0 / jnp.sqrt(observation_space)
    bound2 = 1.0 / jnp.sqrt(hidden)
    w1 = jax.random.uniform(k1, (observation_space, hidden), jnp.float32, -bound1, bound1)
    b1 = jax.random.uniform(k2, (1, hidden), jnp.float32, -bound1, bound1)
    w2 = jax.random.uniform(k3, (hidden, action_space), jnp.float32, -bound2, bound2)
    b2 = jax.random.uniform(k4, (1, action_space), jnp.float32, -bound2, bound2)
    return w1, b1, w2, b2


if __name__ == "__main__":
    observation_space = 16
    action_space = 8
    batch = 4

    key = jax.random.PRNGKey(0)
    kx, kp = jax.random.split(key)
    x = jax.random.normal(kx, (batch, observation_space), jnp.float32)
    w1, b1, w2, b2 = init_params(kp, observation_space, HIDDEN, action_space)

    probs = jax.block_until_ready(policy_network(x, w1, b1, w2, b2))

    # Reference in plain f32 JAX. The kernel uses bf16 matmul operands (f32 accumulation)
    # and an approximate EUP reciprocal, so tolerances cover bf16 operand rounding.
    h_ref = jnp.maximum(x @ w1 + b1, 0.0)
    ref = jax.nn.softmax(h_ref @ w2 + b2, axis=1)

    assert probs.shape == (batch, action_space)
    assert bool(jnp.allclose(probs, ref, atol=2e-2)), "mismatch vs reference"
    assert bool(jnp.allclose(jnp.sum(probs, axis=1), 1.0, atol=5e-3)), "rows must sum to 1"

    print("KERNEL_OK")
</pallas_src>

<mosaic_0001>
module attributes {stable_mosaic.version = 11 : i64} {
  func.func @policy_kernel(%arg0: i32, %arg1: memref<4x16xf32, #tpu.memory_space<vmem>>, %arg2: memref<16x128xbf16, #tpu.memory_space<vmem>>, %arg3: memref<1x128xf32, #tpu.memory_space<vmem>>, %arg4: memref<128x8xbf16, #tpu.memory_space<vmem>>, %arg5: memref<1x8xf32, #tpu.memory_space<vmem>>, %arg6: memref<4x8xf32, #tpu.memory_space<vmem>>) attributes {dimension_semantics = [#tpu.dimension_semantics<parallel>], iteration_bounds = array<i64: 1>, scalar_prefetch = 0 : i64, scratch_operands = 0 : i64, tpu.core_type = #tpu.core_type<tc>, window_params = [{transform_indices = @transform_0, window_bounds = array<i64: 4, 16>}, {pipeline_mode = #tpu.pipeline_mode<synchronous>, transform_indices = @transform_1, window_bounds = array<i64: 16, 128>}, {pipeline_mode = #tpu.pipeline_mode<synchronous>, transform_indices = @transform_2, window_bounds = array<i64: 1, 128>}, {pipeline_mode = #tpu.pipeline_mode<synchronous>, transform_indices = @transform_3, window_bounds = array<i64: 128, 8>}, {pipeline_mode = #tpu.pipeline_mode<synchronous>, transform_indices = @transform_4, window_bounds = array<i64: 1, 8>}, {transform_indices = @transform_5, window_bounds = array<i64: 4, 8>}]} {
    %c0 = arith.constant 0 : index
    %c0_0 = arith.constant 0 : index
    %0 = vector.load %arg1[%c0, %c0_0] : memref<4x16xf32, #tpu.memory_space<vmem>>, vector<4x16xf32>
    %1 = arith.truncf %0 : vector<4x16xf32> to vector<4x16xbf16>
    %c0_1 = arith.constant 0 : index
    %c0_2 = arith.constant 0 : index
    %2 = vector.load %arg2[%c0_1, %c0_2] : memref<16x128xbf16, #tpu.memory_space<vmem>>, vector<16x128xbf16>
    %cst = arith.constant dense<0.000000e+00> : vector<4x128xf32>
    %3 = tpu.matmul %1, %2, %cst {dimension_numbers = #tpu.dot_dimension_numbers<[1], [0], [0], [1], [0, 0, 1, 1], [], []>} : vector<4x16xbf16>, vector<16x128xbf16>, vector<4x128xf32> -> vector<4x128xf32>
    %c0_3 = arith.constant 0 : index
    %c0_4 = arith.constant 0 : index
    %4 = vector.load %arg3[%c0_3, %c0_4] : memref<1x128xf32, #tpu.memory_space<vmem>>, vector<1x128xf32>
    %5 = vector.broadcast %4 : vector<1x128xf32> to vector<4x128xf32>
    %6 = arith.addf %3, %5 : vector<4x128xf32>
    %cst_5 = arith.constant 0.000000e+00 : f32
    %7 = vector.broadcast %cst_5 : f32 to vector<4x128xf32>
    %8 = arith.maximumf %6, %7 : vector<4x128xf32>
    %9 = arith.truncf %8 : vector<4x128xf32> to vector<4x128xbf16>
    %c0_6 = arith.constant 0 : index
    %c0_7 = arith.constant 0 : index
    %10 = vector.load %arg4[%c0_6, %c0_7] : memref<128x8xbf16, #tpu.memory_space<vmem>>, vector<128x8xbf16>
    %cst_8 = arith.constant dense<0.000000e+00> : vector<4x8xf32>
    %11 = tpu.matmul %9, %10, %cst_8 {dimension_numbers = #tpu.dot_dimension_numbers<[1], [0], [0], [1], [0, 0, 1, 1], [], []>} : vector<4x128xbf16>, vector<128x8xbf16>, vector<4x8xf32> -> vector<4x8xf32>
    %c0_9 = arith.constant 0 : index
    %c0_10 = arith.constant 0 : index
    %12 = vector.load %arg5[%c0_9, %c0_10] : memref<1x8xf32, #tpu.memory_space<vmem>>, vector<1x8xf32>
    %13 = vector.broadcast %12 : vector<1x8xf32> to vector<4x8xf32>
    %14 = arith.addf %11, %13 : vector<4x8xf32>
    %cst_11 = arith.constant dense<0xFF800000> : vector<4xf32>
    %15 = vector.multi_reduction <maximumf>, %14, %cst_11 [1] : vector<4x8xf32> to vector<4xf32>
    %16 = vector.shape_cast %15 : vector<4xf32> to vector<4x1xf32>
    %17 = vector.broadcast %16 : vector<4x1xf32> to vector<4x8xf32>
    %18 = arith.subf %14, %17 : vector<4x8xf32>
    %19 = math.exp %18 : vector<4x8xf32>
    %cst_12 = arith.constant dense<0.000000e+00> : vector<4xf32>
    %20 = vector.multi_reduction <add>, %19, %cst_12 [1] : vector<4x8xf32> to vector<4xf32>
    %21 = vector.shape_cast %20 : vector<4xf32> to vector<4x1xf32>
    %22 = tpu.reciprocal %21 {approx = true} : vector<4x1xf32> -> vector<4x1xf32>
    %23 = vector.broadcast %22 : vector<4x1xf32> to vector<4x8xf32>
    %24 = arith.mulf %19, %23 : vector<4x8xf32>
    %c0_13 = arith.constant 0 : index
    %c0_14 = arith.constant 0 : index
    %25 = vector.load %arg6[%c0_13, %c0_14] : memref<4x8xf32, #tpu.memory_space<vmem>>, vector<4x8xf32>
    tpu.vector_store %arg6[%c0_13, %c0_14], %24 {strides = array<i32>} : memref<4x8xf32, #tpu.memory_space<vmem>>, vector<4x8xf32>,
    return
  }
  func.func @transform_0(%arg0: i32) -> (i32, i32) {
    %c0_i32 = arith.constant 0 : i32
    %c0_i32_0 = arith.constant 0 : i32
    return %arg0, %c0_i32 : i32, i32
  }
  func.func @transform_1(%arg0: i32) -> (i32, i32) {
    %c0_i32 = arith.constant 0 : i32
    %c0_i32_0 = arith.constant 0 : i32
    %c0_i32_1 = arith.constant 0 : i32
    return %c0_i32, %c0_i32_0 : i32, i32
  }
  func.func @transform_2(%arg0: i32) -> (i32, i32) {
    %c0_i32 = arith.constant 0 : i32
    %c0_i32_0 = arith.constant 0 : i32
    %c0_i32_1 = arith.constant 0 : i32
    return %c0_i32, %c0_i32_0 : i32, i32
  }
  func.func @transform_3(%arg0: i32) -> (i32, i32) {
    %c0_i32 = arith.constant 0 : i32
    %c0_i32_0 = arith.constant 0 : i32
    %c0_i32_1 = arith.constant 0 : i32
    return %c0_i32, %c0_i32_0 : i32, i32
  }
  func.func @transform_4(%arg0: i32) -> (i32, i32) {
    %c0_i32 = arith.constant 0 : i32
    %c0_i32_0 = arith.constant 0 : i32
    %c0_i32_1 = arith.constant 0 : i32
    return %c0_i32, %c0_i32_0 : i32, i32
  }
  func.func @transform_5(%arg0: i32) -> (i32, i32) {
    %c0_i32 = arith.constant 0 : i32
    %c0_i32_0 = arith.constant 0 : i32
    return %arg0, %c0_i32 : i32, i32
  }
}

</mosaic_0001>

<llo_original>
// kernel: tpu_custom_call.1
$region0: #{tpu_custom_call.1}
  #allocation0 [shape = 'u32[]', space=smem, size = 0x4, offset = 0x4, fixed_abs, tag = 'smem constant byte address 0x4 - core index']
  #allocation1 [shape = 'u32[144,128]{1,0:T(1,128)}', space=vmem, size = 0x12000, scoped, tag = 'internal scratch']
  %s0 = inlined_call_operand.vmem [shape: f32[4,16], index: 0, kind: input, shape index: {}]
  %s1 = inlined_call_operand.vmem [shape: bf16[16,128], index: 1, kind: input, shape index: {}]
  %s2 = inlined_call_operand.vmem [shape: f32[1,128], index: 2, kind: input, shape index: {}]
  %s3 = inlined_call_operand.vmem [shape: bf16[128,8], index: 3, kind: input, shape index: {}]
  %s4 = inlined_call_operand.vmem [shape: f32[1,8], index: 4, kind: input, shape index: {}]
  %s5 = inlined_call_operand.hbm [shape: f32[4,8], index: 5, kind: output, shape index: {}]
  %s6 = sld [smem:[#allocation0]]
  $region30: #{tpu_custom_call.1} parent=0
    _
  %s8 = ssub.s32 1, %s6
  %s9 = scalar_select 0, %s8, %s6
  $region1: #{tpu_custom_call.1} parent=0
    #allocation2 [shape = 'u8[2048]{0}', space=vmem, size = 0x800, scoped, tag = 'output window, operand 0, single buffered']
    #allocation3 [shape = 's32[1]{0}', space=sflag, size = 0x4, scoped, tag = 'scoped memory for tpu_custom_call.1']
    %10 = vsyncpa [#allocation3], 0
    // Predicated region
    $region2: #{tpu_custom_call.1} parent=1 // pred_check
      _
    $region3: #{tpu_custom_call.1} parent=1 // pred_check_branch
      %12 = sbr.rel (0) target = $region5
    $region4: #{tpu_custom_call.1} parent=1 // pred_region
      _
    $region5: #{tpu_custom_call.1} parent=1 // pred_fallthru
      _
    // Predicated region
    $region6: #{tpu_custom_call.1} parent=1 // pred_check
      _
    $region7: #{tpu_custom_call.1} parent=1 // pred_check_branch
      %14 = sbr.rel (0) target = $region9
    $region8: #{tpu_custom_call.1} parent=1 // pred_region
      _
    $region9: #{tpu_custom_call.1} parent=1 // pred_fallthru
      _
    // Predicated region
    $region10: #{tpu_custom_call.1} parent=1 // pred_check
      _
    $region11: #{tpu_custom_call.1} parent=1 // pred_check_branch
      %16 = sbr.rel (0) target = $region13
    $region12: #{tpu_custom_call.1} parent=1 // pred_region
      _
    $region13: #{tpu_custom_call.1} parent=1 // pred_fallthru
      _
    // Predicated region
    $region14: #{tpu_custom_call.1} parent=1 // pred_check
      _
    $region15: #{tpu_custom_call.1} parent=1 // pred_check_branch
      %18 = sbr.rel (0) target = $region17
    $region16: #{tpu_custom_call.1} parent=1 // pred_region
      _
    $region17: #{tpu_custom_call.1} parent=1 // pred_fallthru
      _
    // Predicated region
    $region18: #{tpu_custom_call.1} parent=1 // pred_check
      _
    $region19: #{tpu_custom_call.1} parent=1 // pred_check_branch
      %20 = sbr.rel (0) target = $region21
    $region20: #{tpu_custom_call.1} parent=1 // pred_region
      _
    $region21: #{tpu_custom_call.1} parent=1 // pred_fallthru
      _
    %v22 = vld [vmem:[%s0] sm:$0xf]
    %v23 = vpack.c.bf16 %v22, %v22
    %v24 = vld [vmem:[%s1] sm:$0xf]
    %v25 = vld [vmem:[%s1 + $0x4] sm:$0xf]
    %v26 = vld [vmem:[%s2] sm:$0x1]
    %v28 = vlaneseq
    %v29 = vshrl.u32 %v28, 7
    %v30 = vsub.s32 0, %v29
    %v31 = vrot.slane %v26, %v30
    %v35 = vunpack.c.l.b16 %v24
    %v36 = vunpack.c.l.b16 %v25
    %v37 = vpack.c.b16 %v36, %v35
    %vm39 = vcmask 130048
    %v41 = vsel %vm39, %v23, 0
    %43 = vmatprep.subr.bf16.mxu0 0
    %44 = vmatpush1.bf16.msra.mxu0 0
    %45 = vmatprep.subr.bf16.mxu0 0
    %46 = vmatpush1.bf16.msra.mxu0 0
    %47 = vmatprep.subr.bf16.mxu0 0
    %48 = vmatpush1.bf16.msra.mxu0 0
    %49 = vmatprep.subr.bf16.mxu0 0
    %50 = vmatpush1.bf16.msra.mxu0 0
    %51 = vmatprep.subr.bf16.mxu0 0
    %52 = vmatpush1.bf16.msra.mxu0 0
    %53 = vmatprep.subr.bf16.mxu0 0
    %54 = vmatpush1.bf16.msra.mxu0 0
    %55 = vmatprep.subr.bf16.mxu0 0
    %56 = vmatpush1.bf16.msra.mxu0 0
    %57 = vmatprep.subr.bf16.mxu0 0
    %58 = vmatpush1.bf16.msra.mxu0 %v37
    %59 = vmatprep.subr.bf16.mxu0 0
    %60 = vmatpush2.bf16.msra.mxu0 0
    %61 = vmatprep.subr.bf16.mxu0 0
    %62 = vmatpush2.bf16.msra.mxu0 0
    %63 = vmatprep.subr.bf16.mxu0 0
    %64 = vmatpush2.bf16.msra.mxu0 0
    %65 = vmatprep.subr.bf16.mxu0 0
    %66 = vmatpush2.bf16.msra.mxu0 0
    %67 = vmatprep.subr.bf16.mxu0 0
    %68 = vmatpush2.bf16.msra.mxu0 0
    %69 = vmatprep.subr.bf16.mxu0 0
    %70 = vmatpush2.bf16.msra.mxu0 0
    %71 = vmatprep.subr.bf16.mxu0 0
    %72 = vmatpush2.bf16.msra.mxu0 0
    %73 = vmatprep.subr.bf16.mxu0 0
    %74 = vmatpush2.bf16.msra.mxu0 0
    %75 = vmatprep.mubr.bf16.mxu0 0
    %76 = vmatmul.mubr.bf16.gmra.mxu0 %v41
    %v77 = vpop.f32.mrf.mxu0
    %v78 = vadd.f32 %v31, %v77
    %v79 = vpop.f32.mrf.mxu0
    %v80 = vpop.f32.mrf.mxu0
    %v81 = vpop.f32.mrf.mxu0
    %82 = vdwg.mxu0
    %v83 = vmax.f32 %v78, 0.0
    %v84 = vpack.c.bf16 %v83, %v83
    %v85 = vld [vmem:[%s3] sm:$0xf]
    %v86 = vld [vmem:[%s3 + $0x4] sm:$0xf]
    %v87 = vld [vmem:[%s3 + $0x8] sm:$0xf]
    %v88 = vld [vmem:[%s3 + $0xc] sm:$0xf]
    %v89 = vld [vmem:[%s3 + $0x10] sm:$0xf]
    %v90 = vld [vmem:[%s3 + $0x14] sm:$0xf]
    %v91 = vld [vmem:[%s3 + $0x18] sm:$0xf]
    %v92 = vld [vmem:[%s3 + $0x1c] sm:$0xf]
    %v93 = vld [vmem:[%s3 + $0x20] sm:$0xf]
    %v94 = vld [vmem:[%s3 + $0x24] sm:$0xf]
    %v95 = vld [vmem:[%s3 + $0x28] sm:$0xf]
    %v96 = vld [vmem:[%s3 + $0x2c] sm:$0xf]
    %v97 = vld [vmem:[%s3 + $0x30] sm:$0xf]
    %v98 = vld [vmem:[%s3 + $0x34] sm:$0xf]
    %v99 = vld [vmem:[%s3 + $0x38] sm:$0xf]
    %v100 = vld [vmem:[%s3 + $0x3c] sm:$0xf]
    %v101 = vld [vmem:[%s4] sm:$0x1]
    %v103 = vlaneseq
    %v104 = vshrl.u32 %v103, 7
    %v105 = vsub.s32 0, %v104
    %v106 = vrot.slane %v101, %v105
    %v124 = vunpack.c.l.b16 %v85
    %v125 = vunpack.c.l.b16 %v86
    %v126 = vunpack.c.l.b16 %v87
    %v127 = vunpack.c.l.b16 %v88
    %v128 = vunpack.c.l.b16 %v89
    %v129 = vunpack.c.l.b16 %v90
    %v130 = vunpack.c.l.b16 %v91
    %v131 = vunpack.c.l.b16 %v92
    %v132 = vunpack.c.l.b16 %v93
    %v133 = vunpack.c.l.b16 %v94
    %v134 = vunpack.c.l.b16 %v95
    %v135 = vunpack.c.l.b16 %v96
    %v136 = vunpack.c.l.b16 %v97
    %v137 = vunpack.c.l.b16 %v98
    %v138 = vunpack.c.l.b16 %v99
    %v139 = vunpack.c.l.b16 %v100
    %v140 = vpack.c.b16 %v125, %v124
    %v141 = vpack.c.b16 %v127, %v126
    %v142 = vpack.c.b16 %v129, %v128
    %v143 = vpack.c.b16 %v131, %v130
    %v144 = vpack.c.b16 %v133, %v132
    %v145 = vpack.c.b16 %v135, %v134
    %v146 = vpack.c.b16 %v137, %v136
    %v147 = vpack.c.b16 %v139, %v138
    %156 = vmatprep.subr.bf16.mxu0 0
    %157 = vmatpush1.bf16.msra.mxu0 %v147
    %158 = vmatprep.subr.bf16.mxu0 0
    %159 = vmatpush1.bf16.msra.mxu0 %v146
    %160 = vmatprep.subr.bf16.mxu0 0
    %161 = vmatpush1.bf16.msra.mxu0 %v145
    %162 = vmatprep.subr.bf16.mxu0 0
    %163 = vmatpush1.bf16.msra.mxu0 %v144
    %164 = vmatprep.subr.bf16.mxu0 0
    %165 = vmatpush1.bf16.msra.mxu0 %v143
    %166 = vmatprep.subr.bf16.mxu0 0
    %167 = vmatpush1.bf16.msra.mxu0 %v142
    %168 = vmatprep.subr.bf16.mxu0 0
    %169 = vmatpush1.bf16.msra.mxu0 %v141
    %170 = vmatprep.subr.bf16.mxu0 0
    %171 = vmatpush1.bf16.msra.mxu0 %v140
    %172 = vmatprep.subr.bf16.mxu0 0
    %173 = vmatpush2.bf16.msra.mxu0 0
    %174 = vmatprep.subr.bf16.mxu0 0
    %175 = vmatpush2.bf16.msra.mxu0 0
    %176 = vmatprep.subr.bf16.mxu0 0
    %177 = vmatpush2.bf16.msra.mxu0 0
    %178 = vmatprep.subr.bf16.mxu0 0
    %179 = vmatpush2.bf16.msra.mxu0 0
    %180 = vmatprep.subr.bf16.mxu0 0
    %181 = vmatpush2.bf16.msra.mxu0 0
    %182 = vmatprep.subr.bf16.mxu0 0
    %183 = vmatpush2.bf16.msra.mxu0 0
    %184 = vmatprep.subr.bf16.mxu0 0
    %185 = vmatpush2.bf16.msra.mxu0 0
    %186 = vmatprep.subr.bf16.mxu0 0
    %187 = vmatpush2.bf16.msra.mxu0 0
    %188 = vmatprep.mubr.bf16.mxu0 0
    %189 = vmatmul.mubr.bf16.gmra.mxu0 %v84
    %v190 = vpop.f32.mrf.mxu0
    %v191 = vadd.f32 %v106, %v190
    %v192 = vpop.f32.mrf.mxu0
    %v193 = vpop.f32.mrf.mxu0
    %v194 = vpop.f32.mrf.mxu0
    %195 = vdwg.mxu0
    %vm196 = vcmask 60416
    %v197 = vsel %vm196, %v191, -inf
    %198 = vmax.xlane.f32.xlu0 %v197
    %v199 = vpop.xlane.xlu0 %198
    %v200 = vsub.f32 %v191, %v199
    %v201 = vmul.f32 %v200, 1.442695
    %v202 = vpow.pop %v201
    %v203 = vsel %vm196, %v202, 0.0
    %204 = vadd.xlane.f32.xlu0 %v203
    %v205 = vpop.xlane.xlu0 %204
    %v206 = vrcp.pop %v205
    %v207 = vmul.f32 %v202, %v206
    %208 = vst.msk [vmem:[#allocation2] sm:$0xf] %vm196, %v207
    // Predicated region
    $region22: #{tpu_custom_call.1} parent=1 // pred_check
      _
    $region23: #{tpu_custom_call.1} parent=1 // pred_check_branch
      %210 = sbr.rel (0) target = $region25
    $region24: #{tpu_custom_call.1} parent=1 // pred_region
      %s212 = ssub.s32 64, 64
      %213 = vsyncadd [#allocation3], %s212
      %s215 = sshll.u32 [#allocation2], 4
      %s216 = int_to_ptr.vmem [resolvable:$true] %s215
      %218 = dma.vmem_to_hbm [thread:$0]  %s216, 64, %s5, [#allocation3]
    $region25: #{tpu_custom_call.1} parent=1 // pred_fallthru
      _
    // Predicated region
    $region26: #{tpu_custom_call.1} parent=1 // pred_check
      _
    $region27: #{tpu_custom_call.1} parent=1 // pred_check_branch
      %220 = sbr.rel (0) target = $region29
    $region28: #{tpu_custom_call.1} parent=1 // pred_region
      %221 = dma.done [#allocation3], 64
    $region29: #{tpu_custom_call.1} parent=1 // pred_fallthru
      _
    %222 = vsyncpa [#allocation3], 1

</llo_original>
